<compile_context>
chip_gen: v7x
topology: tpu7x:2x2x1
jax: 0.10.0
libtpu: 0.0.40
codegen_flags: <defaults>
</compile_context>

<pallas_src>
import functools
import math

import jax
import jax.numpy as jnp
from jax.experimental import pallas as pl
from jax.experimental.pallas import tpu as pltpu

_TARGET_TILE_BYTES = 4 * 1024 * 1024   # ~4 MiB per data tile (per stream)
_MAX_ROW_BLOCK = 512                   # sublane-axis tile cap
_MAX_VMEM_LIMIT = 56 * 1024 * 1024     # headroom under v7x 64 MiB physical VMEM


def _cdiv(a, b):
    return -(-a // b)


def _round_up(n, m):
    return ((n + m - 1) // m) * m


def _pick_block_dim(n, mult, cap):
    """Block size along one axis: `n` itself (full dim) if n <= mult, else a
    multiple of `mult` capped at `cap`. Non-divisible remainders become masked
    edge blocks (no padding traffic)."""
    if n <= mult:
        return n
    cap = max(mult, (cap // mult) * mult)
    return min(cap, (n // mult) * mult)


def _cross_stitch_kernel(x1_ref, x2_ref, s_ref, o1_ref, o2_ref, *,
                         coeff_on_rows, compute_dtype):
    x1 = x1_ref[...].astype(compute_dtype)
    x2 = x2_ref[...].astype(compute_dtype)
    s = s_ref[...]
    if coeff_on_rows:     # s: (rb, 4) — per-row coefficients, broadcast along lanes
        a1, b1, a2, b2 = s[:, 0:1], s[:, 1:2], s[:, 2:3], s[:, 3:4]
    else:                 # s: (4, lb) — per-lane coefficients, broadcast along sublanes
        a1, b1, a2, b2 = s[0:1, :], s[1:2, :], s[2:3, :], s[3:4, :]
    o1_ref[...] = (x1 * a1 + x2 * b1).astype(o1_ref.dtype)
    o2_ref[...] = (x1 * a2 + x2 * b2).astype(o2_ref.dtype)


def _cross_stitch_2d(x1f, x2f, coeffs, coeff_on_rows, compute_dtype):
    """x*f: (R, L) slabs; coeffs: (R, 4) if coeff_on_rows else (4, L)."""
    R, L = x1f.shape
    dtype = x1f.dtype
    itemsize = jnp.dtype(dtype).itemsize
    sub_mult = {4: 8, 2: 16, 1: 32}.get(itemsize, 8)

    rb = _pick_block_dim(R, sub_mult, _MAX_ROW_BLOCK)
    lane_cap = max(128, (_TARGET_TILE_BYTES // max(1, rb * itemsize)) // 128 * 128)
    lb = _pick_block_dim(L, 128, lane_cap)

    gr, gl = _cdiv(R, rb), _cdiv(L, lb)
    # Megacore: make sure at least one "parallel" grid axis has >= 2 steps.
    if gr * gl == 1:
        if L >= 256:
            lb = _round_up(_cdiv(L, 2), 128)
            gl = _cdiv(L, lb)
        elif R >= 2 * sub_mult:
            rb = _round_up(_cdiv(R, 2), sub_mult)
            gr = _cdiv(R, rb)

    kernel = functools.partial(_cross_stitch_kernel,
                               coeff_on_rows=coeff_on_rows,
                               compute_dtype=compute_dtype)

    if coeff_on_rows:
        # lane blocks innermost -> coeff block index (i, 0) is re-used across
        # the inner axis (single tiny DMA per row block).
        grid = (gr, gl)
        x_spec = pl.BlockSpec((rb, lb), lambda i, j: (i, j))
        s_spec = pl.BlockSpec((rb, 4), lambda i, j: (i, 0))
    else:
        # row blocks innermost -> coeff block index (0, j) is re-used across
        # the inner axis.
        grid = (gl, gr)
        x_spec = pl.BlockSpec((rb, lb), lambda j, i: (i, j))
        s_spec = pl.BlockSpec((4, lb), lambda j, i: (0, j))

    out_sd = jax.ShapeDtypeStruct((R, L), dtype)
    coeff_itemsize = jnp.dtype(coeffs.dtype).itemsize
    tile_bytes = rb * lb * itemsize
    coeff_tile_bytes = (rb * 4 if coeff_on_rows else 4 * lb) * coeff_itemsize
    # 2 inputs + 2 outputs, double-buffered, + coeff tiles + compiler scratch margin.
    vmem_limit = min(_MAX_VMEM_LIMIT,
                     8 * tile_bytes + 2 * coeff_tile_bytes + (8 << 20))

    o1, o2 = pl.pallas_call(
        kernel,
        out_shape=(out_sd, out_sd),
        grid_spec=pltpu.PrefetchScalarGridSpec(
            num_scalar_prefetch=0,
            grid=grid,
            in_specs=[x_spec, x_spec, s_spec],
            out_specs=(x_spec, x_spec),
        ),
        compiler_params=pltpu.CompilerParams(
            dimension_semantics=("parallel", "parallel"),
            vmem_limit_bytes=vmem_limit,
        ),
        cost_estimate=pl.CostEstimate(
            flops=6 * R * L,
            transcendentals=0,
            bytes_accessed=4 * R * L * itemsize + coeffs.size * coeff_itemsize,
        ),
    )(x1f, x2f, coeffs)
    return o1, o2


class CrossStitchUnits:
    """JAX/Pallas port of the PyTorch CrossStitchUnits module (forward only).

    Takes (out_dim, layer_type) instead of the two wrapped nn.Modules; the
    forward math is identical to the PyTorch stack/permute/mul/sum pipeline.
    """

    def __init__(self, out_dim: int, layer_type: str, init: float = 1.0):
        assert layer_type in ("linear", "conv2D", "conv1D")
        self.out_dim = out_dim
        self.type = layer_type
        ones = jnp.ones((out_dim,), jnp.float32)
        # mat_1 = [[init, 1-init]] * out_dim ; mat_2 = [[1-init, init]] * out_dim
        self.mat_1 = jnp.stack([ones * init, ones * (1.0 - init)], axis=1)
        self.mat_2 = jnp.stack([ones * (1.0 - init), ones * init], axis=1)

    def _coeff4(self):
        # (out_dim, 4): [m1a, m1b, m2a, m2b] per channel, f32
        return jnp.stack(
            [self.mat_1[:, 0], self.mat_1[:, 1], self.mat_2[:, 0], self.mat_2[:, 1]],
            axis=1,
        ).astype(jnp.float32)

    def __call__(self, x1, x2):
        assert x1.shape == x2.shape and x1.dtype == x2.dtype
        if x1.dtype == jnp.float32 or x1.dtype == jnp.bfloat16:
            compute_dtype = x1.dtype      # bf16 VALU on v6e/v7x: no f32 upcast
        else:
            compute_dtype = jnp.float32
        coeff4 = self._coeff4().astype(compute_dtype)    # (C, 4)

        if self.type in ("conv2D", "conv1D"):
            B, C = x1.shape[0], x1.shape[1]
            S = 1
            for d in x1.shape[2:]:
                S *= d
            if S % 128 != 0 and (C * S) % 128 == 0:
                # Fold channel into lanes: lane-dense, coeff repeats every S lanes.
                R, L = B, C * S
                coeffs = jnp.repeat(coeff4.T, S, axis=1)       # (4, C*S)
                coeff_on_rows = False
            else:
                # Channel varies along rows; lanes = spatial.
                R, L = B * C, S
                coeffs = jnp.tile(coeff4, (B, 1))              # (B*C, 4)
                coeff_on_rows = True
            x1f = x1.reshape(R, L)
            x2f = x2.reshape(R, L)
        else:  # linear: feature axis is the last axis -> lanes (no transposes)
            F = x1.shape[-1]
            N = 1
            for d in x1.shape[:-1]:
                N *= d
            coeffs = coeff4.T                                  # (4, F)
            R, L = N, F
            if F % 128 != 0:
                k0 = 128 // math.gcd(F, 128)
                if N % k0 == 0:
                    # Re-chunk so the lane axis is lcm(F, 128): lane-dense,
                    # coeff pattern repeats every F lanes.
                    R, L = N // k0, F * k0
                    coeffs = jnp.tile(coeffs, (1, k0))         # (4, F*k0)
            x1f = x1.reshape(R, L)
            x2f = x2.reshape(R, L)
            coeff_on_rows = False

        o1, o2 = _cross_stitch_2d(x1f, x2f, coeffs, coeff_on_rows, compute_dtype)
        return o1.reshape(x1.shape), o2.reshape(x1.shape)


def _reference(x1, x2, mat_1, mat_2, layer_type):
    """Pure-JAX reference mirroring the PyTorch forward exactly."""
    if layer_type == "conv2D":
        a = lambda m, k: m[None, :, None, None, k]
    elif layer_type == "conv1D":
        a = lambda m, k: m[None, :, None, k]
    else:  # linear: channel == last axis
        a = lambda m, k: m[:, k]
    r1 = x1 * a(mat_1, 0) + x2 * a(mat_1, 1)
    r2 = x1 * a(mat_2, 0) + x2 * a(mat_2, 1)
    return r1, r2


if __name__ == "__main__":
    key = jax.random.PRNGKey(0)
    init = 0.75  # non-trivial mixing so the kernel math is actually exercised

    cases = [
        # (layer_type, shape, out_dim, dtype)
        ("conv2D", (2, 4, 16, 16), 4, jnp.float32),   # lane-aligned, coeff-on-rows
        ("conv1D", (2, 4, 128), 4, jnp.float32),      # lane-aligned, coeff-on-rows
        ("linear", (16, 8), 8, jnp.float32),          # re-chunked to (1, 128) lanes
        ("conv2D", (2, 8, 4, 4), 8, jnp.float32),     # channel folded into lanes
        ("conv2D", (2, 3, 7, 9), 3, jnp.float32),     # unaligned fallback (masked)
        ("linear", (3, 5, 33), 33, jnp.float32),      # unaligned fallback (masked)
        ("conv2D", (2, 4, 16, 16), 4, jnp.bfloat16),  # bf16 compute path
    ]

    ok = True
    for layer_type, shape, out_dim, dtype in cases:
        key, k1, k2 = jax.random.split(key, 3)
        x1 = jax.random.normal(k1, shape, dtype=jnp.float32).astype(dtype)
        x2 = jax.random.normal(k2, shape, dtype=jnp.float32).astype(dtype)

        unit = CrossStitchUnits(out_dim=out_dim, layer_type=layer_type, init=init)
        r1, r2 = unit(x1, x2)
        jax.block_until_ready((r1, r2))

        e1, e2 = _reference(x1.astype(jnp.float32), x2.astype(jnp.float32),
                            unit.mat_1, unit.mat_2, layer_type)
        tol = 1e-5 if dtype == jnp.float32 else 5e-2
        ok &= bool(jnp.allclose(r1.astype(jnp.float32), e1, atol=tol, rtol=tol))
        ok &= bool(jnp.allclose(r2.astype(jnp.float32), e2, atol=tol, rtol=tol))

    if ok:
        print("KERNEL_OK")
    else:
        print("KERNEL_MISMATCH")
</pallas_src>

<mosaic_0001>
module attributes {stable_mosaic.version = 11 : i64} {
  func.func @_cross_stitch_kernel(%arg0: i32, %arg1: i32, %arg2: memref<8x128xf32, #tpu.memory_space<vmem>>, %arg3: memref<8x128xf32, #tpu.memory_space<vmem>>, %arg4: memref<8x4xf32, #tpu.memory_space<vmem>>, %arg5: memref<8x128xf32, #tpu.memory_space<vmem>>, %arg6: memref<8x128xf32, #tpu.memory_space<vmem>>) attributes {dimension_semantics = [#tpu.dimension_semantics<parallel>, #tpu.dimension_semantics<parallel>], iteration_bounds = array<i64: 1, 2>, scalar_prefetch = 0 : i64, scratch_operands = 0 : i64, tpu.core_type = #tpu.core_type<tc>, window_params = [{transform_indices = @transform_0, window_bounds = array<i64: 8, 128>}, {transform_indices = @transform_1, window_bounds = array<i64: 8, 128>}, {transform_indices = @transform_2, window_bounds = array<i64: 8, 4>}, {transform_indices = @transform_3, window_bounds = array<i64: 8, 128>}, {transform_indices = @transform_4, window_bounds = array<i64: 8, 128>}]} {
    %c0 = arith.constant 0 : index
    %c0_0 = arith.constant 0 : index
    %0 = vector.load %arg2[%c0, %c0_0] : memref<8x128xf32, #tpu.memory_space<vmem>>, vector<8x128xf32>
    %c0_1 = arith.constant 0 : index
    %c0_2 = arith.constant 0 : index
    %1 = vector.load %arg3[%c0_1, %c0_2] : memref<8x128xf32, #tpu.memory_space<vmem>>, vector<8x128xf32>
    %c0_3 = arith.constant 0 : index
    %c0_4 = arith.constant 0 : index
    %2 = vector.load %arg4[%c0_3, %c0_4] : memref<8x4xf32, #tpu.memory_space<vmem>>, vector<8x4xf32>
    %3 = vector.extract_strided_slice %2 {offsets = [0, 0], sizes = [8, 1], strides = [1, 1]} : vector<8x4xf32> to vector<8x1xf32>
    %4 = vector.extract_strided_slice %2 {offsets = [0, 1], sizes = [8, 1], strides = [1, 1]} : vector<8x4xf32> to vector<8x1xf32>
    %5 = vector.extract_strided_slice %2 {offsets = [0, 2], sizes = [8, 1], strides = [1, 1]} : vector<8x4xf32> to vector<8x1xf32>
    %6 = vector.extract_strided_slice %2 {offsets = [0, 3], sizes = [8, 1], strides = [1, 1]} : vector<8x4xf32> to vector<8x1xf32>
    %7 = vector.broadcast %3 : vector<8x1xf32> to vector<8x128xf32>
    %8 = arith.mulf %0, %7 : vector<8x128xf32>
    %9 = vector.broadcast %4 : vector<8x1xf32> to vector<8x128xf32>
    %10 = arith.mulf %1, %9 : vector<8x128xf32>
    %11 = arith.addf %8, %10 : vector<8x128xf32>
    %c0_5 = arith.constant 0 : index
    %c0_6 = arith.constant 0 : index
    %12 = vector.load %arg5[%c0_5, %c0_6] : memref<8x128xf32, #tpu.memory_space<vmem>>, vector<8x128xf32>
    tpu.vector_store %arg5[%c0_5, %c0_6], %11 {strides = array<i32>} : memref<8x128xf32, #tpu.memory_space<vmem>>, vector<8x128xf32>,
    %13 = vector.broadcast %5 : vector<8x1xf32> to vector<8x128xf32>
    %14 = arith.mulf %0, %13 : vector<8x128xf32>
    %15 = vector.broadcast %6 : vector<8x1xf32> to vector<8x128xf32>
    %16 = arith.mulf %1, %15 : vector<8x128xf32>
    %17 = arith.addf %14, %16 : vector<8x128xf32>
    %c0_7 = arith.constant 0 : index
    %c0_8 = arith.constant 0 : index
    %18 = vector.load %arg6[%c0_7, %c0_8] : memref<8x128xf32, #tpu.memory_space<vmem>>, vector<8x128xf32>
    tpu.vector_store %arg6[%c0_7, %c0_8], %17 {strides = array<i32>} : memref<8x128xf32, #tpu.memory_space<vmem>>, vector<8x128xf32>,
    return
  }
  func.func @transform_0(%arg0: i32, %arg1: i32) -> (i32, i32) {
    %c0_i32 = arith.constant 0 : i32
    return %arg0, %arg1 : i32, i32
  }
  func.func @transform_1(%arg0: i32, %arg1: i32) -> (i32, i32) {
    %c0_i32 = arith.constant 0 : i32
    return %arg0, %arg1 : i32, i32
  }
  func.func @transform_2(%arg0: i32, %arg1: i32) -> (i32, i32) {
    %c0_i32 = arith.constant 0 : i32
    %c0_i32_0 = arith.constant 0 : i32
    return %arg0, %c0_i32 : i32, i32
  }
  func.func @transform_3(%arg0: i32, %arg1: i32) -> (i32, i32) {
    %c0_i32 = arith.constant 0 : i32
    return %arg0, %arg1 : i32, i32
  }
  func.func @transform_4(%arg0: i32, %arg1: i32) -> (i32, i32) {
    %c0_i32 = arith.constant 0 : i32
    return %arg0, %arg1 : i32, i32
  }
}

</mosaic_0001>

<llo_original>
// kernel: tpu_custom_call.1
$region0: #{tpu_custom_call.1}
  #allocation0 [shape = 'u32[]', space=smem, size = 0x4, offset = 0x4, fixed_abs, tag = 'smem constant byte address 0x4 - core index']
  #allocation1 [shape = 'u32[144,128]{1,0:T(1,128)}', space=vmem, size = 0x12000, scoped, tag = 'internal scratch']
  %s0 = inlined_call_operand.hbm [shape: f32[8,256], index: 0, kind: input, shape index: {}]
  %s1 = inlined_call_operand.hbm [shape: f32[8,256], index: 1, kind: input, shape index: {}]
  %s2 = inlined_call_operand.vmem [shape: f32[8,4], index: 2, kind: input, shape index: {}]
  %s3 = inlined_call_operand.hbm [shape: f32[8,256], index: 3, kind: output, shape index: {0}]
  %s4 = inlined_call_operand.hbm [shape: f32[8,256], index: 4, kind: output, shape index: {1}]
  %5 = xla_tuple %s3, %s4
  %s6 = sld [smem:[#allocation0]]
  $region61: #{tpu_custom_call.1} parent=0
    _
  %s8 = ssub.s32 1, %s6
  %s9 = scalar_select 0, %s8, %s6
  $region1: #{tpu_custom_call.1} parent=0
    #allocation2 [shape = 'u8[8192]{0}', space=vmem, size = 0x2000, scoped, tag = 'input window, operand 0']
    #allocation3 [shape = 's32[2]{0}', space=sflag, size = 0x8, scoped, tag = 'scoped memory for tpu_custom_call.1']
    #allocation4 [shape = 's32[2]{0}', space=sflag, size = 0x8, scoped, tag = 'scoped memory for tpu_custom_call.1']
    #allocation5 [shape = 'u8[8192]{0}', space=vmem, size = 0x2000, scoped, tag = 'input window, operand 1']
    #allocation6 [shape = 's32[2]{0}', space=sflag, size = 0x8, scoped, tag = 'scoped memory for tpu_custom_call.1']
    #allocation7 [shape = 'u8[8192]{0}', space=vmem, size = 0x2000, scoped, tag = 'output window, operand 0']
    #allocation8 [shape = 'u8[8192]{0}', space=vmem, size = 0x2000, scoped, tag = 'output window, operand 1']
    #allocation9 [shape = 's32[2]{0}', space=sflag, size = 0x8, scoped, tag = 'scoped memory for tpu_custom_call.1']
    %10 = vsyncpa [#allocation3], 0
    %s11 = scalar_lea.sflag [#allocation3], 1
    %12 = vsyncpa %s11, 0
    %13 = vsyncpa [#allocation6], 0
    %s14 = scalar_lea.sflag [#allocation6], 1
    %15 = vsyncpa %s14, 0
    %16 = vsyncpa [#allocation4], 0
    %s17 = scalar_lea.sflag [#allocation4], 1
    %18 = vsyncpa %s17, 0
    %19 = vsyncpa [#allocation9], 0
    %s20 = scalar_lea.sflag [#allocation9], 1
    %21 = vsyncpa %s20, 0
    loop: start=0, step=1, limit=4
    $region2: #{tpu_custom_call.1} parent=1 // loop_pre_header
      _
    $region3: #{tpu_custom_call.1} parent=1 // loop_header
      %s23 = sphi 0, %s27
      %p24 = scmp.ge.s32.totalorder %s23, 4
      %s30 = sphi 0, %s42
      %s31 = sphi 0, %s38
      %s32 = sphi 0, %s30
      %s33 = sphi 0, %s31
      %s34 = sphi 0, %s32
      %s35 = sphi 0, %s33
      %s47 = sphi 0, %s49
      %s50 = sphi 0, %s47
      %s51 = sphi 0, %s50
      %s67 = sphi 0, %s51
      %s75 = sphi 0, %s77
      %s78 = sphi 0, %s75
      %s79 = sphi 0, %s78
      %s95 = sphi 0, %s79
      %s101 = sphi 0, %s103
      %s104 = sphi 0, %s101
      %s105 = sphi 0, %s104
      %s121 = sphi 0, %s105
      %s129 = sphi 0, %s131
      %s132 = sphi 0, %s129
      %s133 = sphi 0, %s132
      %s149 = sphi 0, %s133
      %s157 = sphi 0, %s159
      %s160 = sphi 0, %s157
      %s161 = sphi 0, %s160
      %s177 = sphi 0, %s161
    $region4: #{tpu_custom_call.1} parent=1 // loop_header_branch
      %26 = sbr.rel (%p24) target = $region8
    $region5: #{tpu_custom_call.1} parent=1 // loop_body
      %s28 = ssub.s32 %s23, 1
      %s29 = ssub.s32 %s23, 2
      %s36 = sadd.s32 1, %s31
      %p37 = scmp.ge.s32.totalorder %s36, 2
      %s38 = scalar_select %p37, 0, %s36
      %s39 = sadd.s32 1, %s30
      %s40 = scalar_select %p37, %s39, %s30
      %p41 = scmp.ge.s32.totalorder %s40, 1
      %s42 = scalar_select %p41, 0, %s40
      %s43 = ssub.s32 %s30, %s42
      %s44 = ssub.s32 %s31, %s38
      %s45 = sor.u32 %s43, %s44
      %p46 = scmp.eq.s32.totalorder %s45, 0
      %s48 = sadd.s32 %s47, 1
      %s49 = scalar_select %p46, %s47, %s48
      %p52 = pneg %p46
      %p53 = scmp.eq.s32.totalorder %s23, 1
      %p54 = por %p52, %p53
      %p55 = scmp.ne.s32.totalorder %s47, %s50
      %p56 = scmp.eq.s32.totalorder %s23, 0
      %p57 = por %p55, %p56
      %p58 = scmp.ne.s32.totalorder %s47, %s50
      %p59 = scmp.eq.s32.totalorder %s28, 1
      %p60 = por %p58, %p59
      %p61 = scmp.ne.s32.totalorder %s50, %s51
      %p62 = scmp.eq.s32.totalorder %s28, 0
      %p63 = por %p61, %p62
      %p64 = scmp.ne.s32.totalorder %s50, %s51
      %p65 = scmp.eq.s32.totalorder %s29, 1
      %p66 = por %p64, %p65
      %p68 = scmp.ne.s32.totalorder %s51, %s67
      %p69 = scmp.eq.s32.totalorder %s29, 0
      %p70 = por %p68, %p69
      %s71 = ssub.s32 %s30, %s42
      %s72 = ssub.s32 %s31, %s38
      %s73 = sor.u32 %s71, %s72
      %p74 = scmp.eq.s32.totalorder %s73, 0
      %s76 = sadd.s32 %s75, 1
      %s77 = scalar_select %p74, %s75, %s76
      %p80 = pneg %p74
      %p81 = scmp.eq.s32.totalorder %s23, 1
      %p82 = por %p80, %p81
      %p83 = scmp.ne.s32.totalorder %s75, %s78
      %p84 = scmp.eq.s32.totalorder %s23, 0
      %p85 = por %p83, %p84
      %p86 = scmp.ne.s32.totalorder %s75, %s78
      %p87 = scmp.eq.s32.totalorder %s28, 1
      %p88 = por %p86, %p87
      %p89 = scmp.ne.s32.totalorder %s78, %s79
      %p90 = scmp.eq.s32.totalorder %s28, 0
      %p91 = por %p89, %p90
      %p92 = scmp.ne.s32.totalorder %s78, %s79
      %p93 = scmp.eq.s32.totalorder %s29, 1
      %p94 = por %p92, %p93
      %p96 = scmp.ne.s32.totalorder %s79, %s95
      %p97 = scmp.eq.s32.totalorder %s29, 0
      %p98 = por %p96, %p97
      %s99 = ssub.s32 %s30, %s42
      %p100 = scmp.eq.s32.totalorder %s99, 0
      %s102 = sadd.s32 %s101, 1
      %s103 = scalar_select %p100, %s101, %s102
      %p106 = pneg %p100
      %p107 = scmp.eq.s32.totalorder %s23, 1
      %p108 = por %p106, %p107
      %p109 = scmp.ne.s32.totalorder %s101, %s104
      %p110 = scmp.eq.s32.totalorder %s23, 0
      %p111 = por %p109, %p110
      %p112 = scmp.ne.s32.totalorder %s101, %s104
      %p113 = scmp.eq.s32.totalorder %s28, 1
      %p114 = por %p112, %p113
      %p115 = scmp.ne.s32.totalorder %s104, %s105
      %p116 = scmp.eq.s32.totalorder %s28, 0
      %p117 = por %p115, %p116
      %p118 = scmp.ne.s32.totalorder %s104, %s105
      %p119 = scmp.eq.s32.totalorder %s29, 1
      %p120 = por %p118, %p119
      %p122 = scmp.ne.s32.totalorder %s105, %s121
      %p123 = scmp.eq.s32.totalorder %s29, 0
      %p124 = por %p122, %p123
      %s125 = ssub.s32 %s30, %s42
      %s126 = ssub.s32 %s31, %s38
      %s127 = sor.u32 %s125, %s126
      %p128 = scmp.eq.s32.totalorder %s127, 0
      %s130 = sadd.s32 %s129, 1
      %s131 = scalar_select %p128, %s129, %s130
      %p134 = pneg %p128
      %p135 = scmp.eq.s32.totalorder %s23, 1
      %p136 = por %p134, %p135
      %p137 = scmp.ne.s32.totalorder %s129, %s132
      %p138 = scmp.eq.s32.totalorder %s23, 0
      %p139 = por %p137, %p138
      %p140 = scmp.ne.s32.totalorder %s129, %s132
      %p141 = scmp.eq.s32.totalorder %s28, 1
      %p142 = por %p140, %p141
      %p143 = scmp.ne.s32.totalorder %s132, %s133
      %p144 = scmp.eq.s32.totalorder %s28, 0
      %p145 = por %p143, %p144
      %p146 = scmp.ne.s32.totalorder %s132, %s133
      %p147 = scmp.eq.s32.totalorder %s29, 1
      %p148 = por %p146, %p147
      %p150 = scmp.ne.s32.totalorder %s133, %s149
      %p151 = scmp.eq.s32.totalorder %s29, 0
      %p152 = por %p150, %p151
      %s153 = ssub.s32 %s30, %s42
      %s154 = ssub.s32 %s31, %s38
      %s155 = sor.u32 %s153, %s154
      %p156 = scmp.eq.s32.totalorder %s155, 0
      %s158 = sadd.s32 %s157, 1
      %s159 = scalar_select %p156, %s157, %s158
      %p162 = pneg %p156
      %p163 = scmp.eq.s32.totalorder %s23, 1
      %p164 = por %p162, %p163
      %p165 = scmp.ne.s32.totalorder %s157, %s160
      %p166 = scmp.eq.s32.totalorder %s23, 0
      %p167 = por %p165, %p166
      %p168 = scmp.ne.s32.totalorder %s157, %s160
      %p169 = scmp.eq.s32.totalorder %s28, 1
      %p170 = por %p168, %p169
      %p171 = scmp.ne.s32.totalorder %s160, %s161
      %p172 = scmp.eq.s32.totalorder %s28, 0
      %p173 = por %p171, %p172
      %p174 = scmp.ne.s32.totalorder %s160, %s161
      %p175 = scmp.eq.s32.totalorder %s29, 1
      %p176 = por %p174, %p175
      %p178 = scmp.ne.s32.totalorder %s161, %s177
      %p179 = scmp.eq.s32.totalorder %s29, 0
      %p180 = por %p178, %p179
      %p181 = scmp.le.s32.totalorder 1, %s23
      %p182 = scmp.lt.s32.totalorder %s23, 3
      %p183 = pnand %p181, %p182
      %p184 = pneg %p183
      // Predicated region
      $region9: #{tpu_custom_call.1} parent=5 // pred_check
        _
      $region10: #{tpu_custom_call.1} parent=5 // pred_check_branch
        %186 = sbr.rel (%p183) target = $region12
      $region11: #{tpu_custom_call.1} parent=5 // pred_region
        %s187 = ssub.s32 %s23, 1
        // Predicated region
        $region13: #{tpu_custom_call.1} parent=11 // pred_check
          %p188 = pneg %p117
        $region14: #{tpu_custom_call.1} parent=11 // pred_check_branch
          %190 = sbr.rel (%p188) target = $region16
        $region15: #{tpu_custom_call.1} parent=11 // pred_region
          %p191 = scmp.lt.s32.totalorder %s32, 0
          %s192 = scalar_select %p191, %s32, 0
          %s193 = smul.addr %s192, 8
          %s194 = scalar_lea.vmem %s2, %s193
        $region16: #{tpu_custom_call.1} parent=11 // pred_fallthru
          _
      $region12: #{tpu_custom_call.1} parent=5 // pred_fallthru
        _
      %p195 = scmp.lt.s32.totalorder %s23, 2
      // Predicated region
      $region17: #{tpu_custom_call.1} parent=5 // pred_check
        %p196 = pneg %p195
      $region18: #{tpu_custom_call.1} parent=5 // pred_check_branch
        %198 = sbr.rel (%p196) target = $region20
      $region19: #{tpu_custom_call.1} parent=5 // pred_region
        // Predicated region
        $region21: #{tpu_custom_call.1} parent=19 // pred_check
          %p199 = pneg %p57
        $region22: #{tpu_custom_call.1} parent=19 // pred_check_branch
          %201 = sbr.rel (%p199) target = $region24
        $region23: #{tpu_custom_call.1} parent=19 // pred_region
          %s202 = sand.u32 %s47, 1
          %s203 = scalar_lea.sflag [#allocation3], %s202
          %s204 = sand.u32 %s47, 1
          %s205 = smul.addr %s204, 8
          %s206 = scalar_lea.vmem [#allocation2], %s205
          %s208 = ssub.s32 128, 128
          %209 = vsyncadd %s203, %s208
          %s210 = smul.addr %s30, 2
          %s211 = sadd.s32 %s31, %s210
          %s212 = smul.addr %s211, 128
          %s213 = scalar_lea.hbm %s0, %s212
          %s215 = sshll.u32 %s206, 4
          %s216 = int_to_ptr.vmem [resolvable:$true] %s215
          %218 = dma.hbm_to_vmem [thread:$0]  %s213, 128, %s216, %s203
        $region24: #{tpu_custom_call.1} parent=19 // pred_fallthru
          _
        // Predicated region
        $region25: #{tpu_custom_call.1} parent=19 // pred_check
          %p219 = pneg %p85
        $region26: #{tpu_custom_call.1} parent=19 // pred_check_branch
          %221 = sbr.rel (%p219) target = $region28
        $region27: #{tpu_custom_call.1} parent=19 // pred_region
          %s222 = sand.u32 %s75, 1
          %s223 = scalar_lea.sflag [#allocation6], %s222
          %s224 = sand.u32 %s75, 1
          %s225 = smul.addr %s224, 8
          %s226 = scalar_lea.vmem [#allocation5], %s225
          %s228 = ssub.s32 128, 128
          %229 = vsyncadd %s223, %s228
          %s230 = smul.addr %s30, 2
          %s231 = sadd.s32 %s31, %s230
          %s232 = smul.addr %s231, 128
          %s233 = scalar_lea.hbm %s1, %s232
          %s235 = sshll.u32 %s226, 4
          %s236 = int_to_ptr.vmem [resolvable:$true] %s235
          %238 = dma.hbm_to_vmem [thread:$0]  %s233, 128, %s236, %s223
        $region28: #{tpu_custom_call.1} parent=19 // pred_fallthru
          _
      $region20: #{tpu_custom_call.1} parent=5 // pred_fallthru
        _
      %p239 = scmp.le.s32.totalorder 1, %s23
      %p240 = scmp.lt.s32.totalorder %s23, 3
      %p241 = pnand %p239, %p240
      %p242 = pneg %p241
      // Predicated region
      $region29: #{tpu_custom_call.1} parent=5 // pred_check
        _
      $region30: #{tpu_custom_call.1} parent=5 // pred_check_branch
        %244 = sbr.rel (%p241) target = $region32
      $region31: #{tpu_custom_call.1} parent=5 // pred_region
        %s245 = ssub.s32 %s23, 1
        %s246 = sand.u32 %s50, 1
        %s247 = scalar_lea.sflag [#allocation3], %s246
        %s248 = sand.u32 %s50, 1
        %s249 = smul.addr %s248, 8
        %s250 = scalar_lea.vmem [#allocation2], %s249
        // Predicated region
        $region33: #{tpu_custom_call.1} parent=31 // pred_check
          %p251 = pneg %p63
        $region34: #{tpu_custom_call.1} parent=31 // pred_check_branch
          %253 = sbr.rel (%p251) target = $region36
        $region35: #{tpu_custom_call.1} parent=31 // pred_region
          %254 = dma.done %s247, 128
        $region36: #{tpu_custom_call.1} parent=31 // pred_fallthru
          _
        %s255 = sand.u32 %s78, 1
        %s256 = scalar_lea.sflag [#allocation6], %s255
        %s257 = sand.u32 %s78, 1
        %s258 = smul.addr %s257, 8
        %s259 = scalar_lea.vmem [#allocation5], %s258
        // Predicated region
        $region37: #{tpu_custom_call.1} parent=31 // pred_check
          %p260 = pneg %p91
        $region38: #{tpu_custom_call.1} parent=31 // pred_check_branch
          %262 = sbr.rel (%p260) target = $region40
        $region39: #{tpu_custom_call.1} parent=31 // pred_region
          %263 = dma.done %s256, 128
        $region40: #{tpu_custom_call.1} parent=31 // pred_fallthru
          _
        %s264 = sand.u32 %s50, 1
        %s265 = scalar_lea.sflag [#allocation3], %s264
        %s266 = sand.u32 %s50, 1
        %s267 = smul.addr %s266, 8
        %s268 = scalar_lea.vmem [#allocation2], %s267
        %p269 = pneg %p63
        %p270 = pneg %p60
        %s271 = sand.u32 %s78, 1
        %s272 = scalar_lea.sflag [#allocation6], %s271
        %s273 = sand.u32 %s78, 1
        %s274 = smul.addr %s273, 8
        %s275 = scalar_lea.vmem [#allocation5], %s274
        %p276 = pneg %p91
        %p277 = pneg %p88
        %p278 = scmp.lt.s32.totalorder %s32, 0
        %s279 = scalar_select %p278, %s32, 0
        %s280 = smul.addr %s279, 8
        %s281 = scalar_lea.vmem %s2, %s280
        %p282 = pneg %p117
        %p283 = pneg %p114
        %p284 = pneg %p145
        %p285 = pneg %p142
        %s286 = sand.u32 %s132, 1
        %s287 = scalar_lea.sflag [#allocation4], %s286
        %s288 = sand.u32 %s132, 1
        %s289 = smul.addr %s288, 8
        %s290 = scalar_lea.vmem [#allocation7], %s289
        %p291 = pneg %p173
        %p292 = pneg %p170
        %s293 = sand.u32 %s160, 1
        %s294 = scalar_lea.sflag [#allocation9], %s293
        %s295 = sand.u32 %s160, 1
        %s296 = smul.addr %s295, 8
        %s297 = scalar_lea.vmem [#allocation8], %s296
        %p298 = scmp.lt.s32.totalorder %s32, 0
        %s299 = scalar_select %p298, %s32, 0
        %s300 = smul.addr %s299, 8
        %s301 = scalar_lea.vmem %s2, %s300
        %v302 = vld [vmem:[%s250] sm:$0xff]
        %v303 = vld [vmem:[%s259] sm:$0xff]
        %v304 = vld [vmem:[%s301] sm:$0xff]
        %306 = vset.pattern.permute.xlu0 0
        %307 = vperm.xlu0 %306, %v304
        %v308 = vpop.permute.xlu0 %307
        %v310 = vmul.f32 %v302, %v308
        %311 = vset.pattern.permute.xlu0 1
        %312 = vperm.xlu0 %311, %v304
        %v313 = vpop.permute.xlu0 %312
        %v315 = vmul.f32 %v303, %v313
        %v316 = vadd.f32 %v310, %v315
        %317 = vst [vmem:[%s290] sm:$0xff] %v316
        %318 = vset.pattern.permute.xlu0 2
        %319 = vperm.xlu0 %318, %v304
        %v320 = vpop.permute.xlu0 %319
        %v322 = vmul.f32 %v302, %v320
        %323 = vset.pattern.permute.xlu0 3
        %324 = vperm.xlu0 %323, %v304
        %v325 = vpop.permute.xlu0 %324
        %v327 = vmul.f32 %v303, %v325
        %v328 = vadd.f32 %v322, %v327
        %329 = vst [vmem:[%s297] sm:$0xff] %v328
        %s330 = sand.u32 %s132, 1
        %s331 = scalar_lea.sflag [#allocation4], %s330
        %s332 = sand.u32 %s132, 1
        %s333 = smul.addr %s332, 8
        %s334 = scalar_lea.vmem [#allocation7], %s333
        %s335 = sand.u32 %s160, 1
        %s336 = scalar_lea.sflag [#allocation9], %s335
        %s337 = sand.u32 %s160, 1
        %s338 = smul.addr %s337, 8
        %s339 = scalar_lea.vmem [#allocation8], %s338
        // Predicated region
        $region41: #{tpu_custom_call.1} parent=31 // pred_check
          %p340 = pneg %p142
        $region42: #{tpu_custom_call.1} parent=31 // pred_check_branch
          %342 = sbr.rel (%p340) target = $region44
        $region43: #{tpu_custom_call.1} parent=31 // pred_region
          %s344 = ssub.s32 128, 128
          %345 = vsyncadd %s331, %s344
          %s346 = smul.addr %s32, 2
          %s347 = sadd.s32 %s33, %s346
          %s348 = smul.addr %s347, 128
          %s349 = scalar_lea.hbm %s3, %s348
          %s351 = sshll.u32 %s334, 4
          %s352 = int_to_ptr.vmem [resolvable:$true] %s351
          %354 = dma.vmem_to_hbm [thread:$0]  %s352, 128, %s349, %s331
        $region44: #{tpu_custom_call.1} parent=31 // pred_fallthru
          _
        // Predicated region
        $region45: #{tpu_custom_call.1} parent=31 // pred_check
          %p355 = pneg %p170
        $region46: #{tpu_custom_call.1} parent=31 // pred_check_branch
          %357 = sbr.rel (%p355) target = $region48
        $region47: #{tpu_custom_call.1} parent=31 // pred_region
          %s359 = ssub.s32 128, 128
          %360 = vsyncadd %s336, %s359
          %s361 = smul.addr %s32, 2
          %s362 = sadd.s32 %s33, %s361
          %s363 = smul.addr %s362, 128
          %s364 = scalar_lea.hbm %s4, %s363
          %s366 = sshll.u32 %s339, 4
          %s367 = int_to_ptr.vmem [resolvable:$true] %s366
          %369 = dma.vmem_to_hbm [thread:$0]  %s367, 128, %s364, %s336
        $region48: #{tpu_custom_call.1} parent=31 // pred_fallthru
          _
      $region32: #{tpu_custom_call.1} parent=5 // pred_fallthru
        _
      %p370 = scmp.le.s32.totalorder 2, %s23
      // Predicated region
      $region49: #{tpu_custom_call.1} parent=5 // pred_check
        %p371 = pneg %p370
      $region50: #{tpu_custom_call.1} parent=5 // pred_check_branch
        %373 = sbr.rel (%p371) target = $region52
      $region51: #{tpu_custom_call.1} parent=5 // pred_region
        %s374 = ssub.s32 %s23, 2
        // Predicated region
        $region53: #{tpu_custom_call.1} parent=51 // pred_check
          %p375 = pneg %p148
        $region54: #{tpu_custom_call.1} parent=51 // pred_check_branch
          %377 = sbr.rel (%p375) target = $region56
        $region55: #{tpu_custom_call.1} parent=51 // pred_region
          %s378 = sand.u32 %s133, 1
          %s379 = scalar_lea.sflag [#allocation4], %s378
          %s380 = sand.u32 %s133, 1
          %s381 = smul.addr %s380, 8
          %s382 = scalar_lea.vmem [#allocation7], %s381
          %383 = dma.done %s379, 128
        $region56: #{tpu_custom_call.1} parent=51 // pred_fallthru
          _
        // Predicated region
        $region57: #{tpu_custom_call.1} parent=51 // pred_check
          %p384 = pneg %p176
        $region58: #{tpu_custom_call.1} parent=51 // pred_check_branch
          %386 = sbr.rel (%p384) target = $region60
        $region59: #{tpu_custom_call.1} parent=51 // pred_region
          %s387 = sand.u32 %s161, 1
          %s388 = scalar_lea.sflag [#allocation9], %s387
          %s389 = sand.u32 %s161, 1
          %s390 = smul.addr %s389, 8
          %s391 = scalar_lea.vmem [#allocation8], %s390
          %392 = dma.done %s388, 128
        $region60: #{tpu_custom_call.1} parent=51 // pred_fallthru
          _
      $region52: #{tpu_custom_call.1} parent=5 // pred_fallthru
        _
    $region6: #{tpu_custom_call.1} parent=1 // loop_footer
      %s27 = sadd.s32 1, %s23
    $region7: #{tpu_custom_call.1} parent=1 // loop_footer_branch
      %22 = sbr.rel target = $region3
    $region8: #{tpu_custom_call.1} parent=1 // loop_exit
      _
    %393 = vsyncpa [#allocation3], 1
    %s394 = scalar_lea.sflag [#allocation3], 1
    %395 = vsyncpa %s394, 1
    %396 = vsyncpa [#allocation6], 1
    %s397 = scalar_lea.sflag [#allocation6], 1
    %398 = vsyncpa %s397, 1
    %399 = vsyncpa [#allocation4], 1
    %s400 = scalar_lea.sflag [#allocation4], 1
    %401 = vsyncpa %s400, 1
    %402 = vsyncpa [#allocation9], 1
    %s403 = scalar_lea.sflag [#allocation9], 1
    %404 = vsyncpa %s403, 1

</llo_original>
